<compile_context>
chip_gen: v7x
topology: tpu7x:2x2x1
jax: 0.10.0
libtpu: 0.0.40
codegen_flags: <defaults>
</compile_context>

<pallas_src>
import functools

import jax
import jax.numpy as jnp
import numpy as np
from jax.experimental import pallas as pl
from jax.experimental.pallas import tpu as pltpu


# ---------------------------------------------------------------------------
# Kernel
# ---------------------------------------------------------------------------
def _layernorm_kernel(x_ref, gamma_ref, beta_ref, out_ref, *, eps, rms):
    """Normalize a (T, H) row tile; gamma/beta blocks are (1, 1, H)."""
    x = x_ref[0].astype(jnp.float32)                      # (T, H)

    if rms:
        var = jnp.mean(x * x, axis=-1, keepdims=True)     # (T, 1)
        o = x * jax.lax.rsqrt(var + eps)
    else:
        u = jnp.mean(x, axis=-1, keepdims=True)           # (T, 1)
        d = x - u
        s = jnp.mean(d * d, axis=-1, keepdims=True)       # (T, 1)
        o = d * jax.lax.rsqrt(s + eps)

    g = gamma_ref[0].astype(jnp.float32)                  # (1, H)
    b = beta_ref[0].astype(jnp.float32)                   # (1, H)
    out_ref[0] = (g * o + b).astype(out_ref.dtype)


def _row_tile(m, max_rows):
    """Largest row-tile <= max_rows that is a multiple of 8 and divides m."""
    if m <= max_rows:
        return m
    t = (max_rows // 8) * 8
    while t >= 8:
        if m % t == 0:
            return t
        t -= 8
    return m  # fallback: whole extent (always legal: block == full dim)


# ---------------------------------------------------------------------------
# Wrapper
# ---------------------------------------------------------------------------
def layernorm_forward(
    x_list,
    weight,
    bias=None,
    *,
    eps=1e-12,
    mode="normal",
    conditional=False,
    dense1_w=None,
    dense2_w=None,
    max_rows=512,
):
    """Pallas forward of the LayerNorm module.

    x_list mirrors the PyTorch signature: x_list[0] is the input tensor
    (B, ..., H); x_list[1] is the conditioning vector (B, cond) when
    `conditional=True`.
    """
    inputs = x_list[0]
    orig_shape = inputs.shape
    B = orig_shape[0]
    H = orig_shape[-1]
    M = 1
    for d in orig_shape[1:-1]:
        M *= int(d)
    x3 = inputs.reshape(B, M, H)                          # free wrapper reshape

    w = jnp.asarray(weight, jnp.float32)
    b_vec = (jnp.zeros((H,), jnp.float32) if bias is None
             else jnp.asarray(bias, jnp.float32))

    if conditional:
        # Fold the (tiny) conditional linears into per-batch gamma/beta.
        cond = x_list[1].reshape(B, -1).astype(jnp.float32)
        gamma = (w[None, :] + cond @ dense1_w.T.astype(jnp.float32)).reshape(B, 1, H)
        beta = (b_vec[None, :] + cond @ dense2_w.T.astype(jnp.float32)).reshape(B, 1, H)
        gb_map = lambda b, r: (b, 0, 0)
    else:
        gamma = w.reshape(1, 1, H)
        beta = b_vec.reshape(1, 1, H)
        gb_map = lambda b, r: (0, 0, 0)

    T = _row_tile(M, max_rows)
    grid = (B, M // T)
    rms = (mode == "rmsnorm")

    kernel = functools.partial(_layernorm_kernel, eps=float(eps), rms=rms)

    n_rows = B * M
    itemsize = jnp.dtype(x3.dtype).itemsize
    cost = pl.CostEstimate(
        flops=int((6 if rms else 9) * n_rows * H),
        transcendentals=int(n_rows),
        bytes_accessed=int(2 * n_rows * H * itemsize + (gamma.size + beta.size) * 4),
    )

    out = pl.pallas_call(
        kernel,
        out_shape=jax.ShapeDtypeStruct((B, M, H), inputs.dtype),
        grid_spec=pltpu.PrefetchScalarGridSpec(
            num_scalar_prefetch=0,
            grid=grid,
            in_specs=[
                pl.BlockSpec((1, T, H), lambda b, r: (b, r, 0)),  # x rows
                pl.BlockSpec((1, 1, H), gb_map),                  # gamma
                pl.BlockSpec((1, 1, H), gb_map),                  # beta
            ],
            out_specs=pl.BlockSpec((1, T, H), lambda b, r: (b, r, 0)),
        ),
        compiler_params=pltpu.CompilerParams(
            dimension_semantics=("parallel", "parallel"),
        ),
        cost_estimate=cost,
    )(x3, gamma, beta)

    return out.reshape(orig_shape)


# ---------------------------------------------------------------------------
# Pure-JAX reference mirroring the PyTorch module exactly
# ---------------------------------------------------------------------------
def reference_forward(
    x_list,
    weight,
    bias=None,
    *,
    eps=1e-12,
    mode="normal",
    conditional=False,
    dense1_w=None,
    dense2_w=None,
):
    inputs = x_list[0]
    if mode == "rmsnorm":
        variance = jnp.mean(inputs.astype(jnp.float32) ** 2, axis=-1, keepdims=True)
        o = inputs * jax.lax.rsqrt(variance + eps)
    else:
        u = jnp.mean(inputs, axis=-1, keepdims=True)
        s = jnp.mean((inputs - u) ** 2, axis=-1, keepdims=True)
        o = (inputs - u) / jnp.sqrt(s + eps)
    b = 0.0 if bias is None else bias
    if conditional:
        cond = x_list[1]
        for _ in range(inputs.ndim - cond.ndim):
            cond = cond[:, None, ...]                    # torch unsqueeze(dim=1)
        return (weight + cond @ dense1_w.T) * o + (b + cond @ dense2_w.T)
    return weight * o + b


# ---------------------------------------------------------------------------
# Self-test
# ---------------------------------------------------------------------------
if __name__ == "__main__":
    key = jax.random.PRNGKey(0)
    k1, k2, k3, k4, k5, k6, k7 = jax.random.split(key, 7)

    B, L, H, COND = 2, 8, 32, 16

    x = jax.random.normal(k1, (B, L, H), jnp.float32)
    w = 1.0 + 0.1 * jax.random.normal(k2, (H,), jnp.float32)
    b = 0.1 * jax.random.normal(k3, (H,), jnp.float32)

    # --- case 1: standard layernorm, with bias, 3-D input (B, L, H) ---------
    out1 = jax.block_until_ready(layernorm_forward([x], w, b))
    ref1 = jax.block_until_ready(reference_forward([x], w, b))
    np.testing.assert_allclose(np.asarray(out1), np.asarray(ref1),
                               rtol=1e-5, atol=1e-5)

    # --- case 2: rmsnorm mode, no bias (module built with bias=False) -------
    out2 = jax.block_until_ready(layernorm_forward([x], w, None, mode="rmsnorm"))
    ref2 = jax.block_until_ready(reference_forward([x], w, None, mode="rmsnorm"))
    np.testing.assert_allclose(np.asarray(out2), np.asarray(ref2),
                               rtol=1e-5, atol=1e-5)

    # --- case 3: conditional layernorm on a 4-D W2NER grid tensor -----------
    # (dense1/dense2 are zero-initialised in the module but trainable; use
    #  non-zero weights here to actually exercise the conditional path.)
    xg = jax.random.normal(k4, (B, L, L, H), jnp.float32)
    cond = jax.random.normal(k5, (B, COND), jnp.float32)
    d1 = 0.02 * jax.random.normal(k6, (H, COND), jnp.float32)
    d2 = 0.02 * jax.random.normal(k7, (H, COND), jnp.float32)
    out3 = jax.block_until_ready(
        layernorm_forward([xg, cond], w, b, conditional=True,
                          dense1_w=d1, dense2_w=d2))
    ref3 = jax.block_until_ready(
        reference_forward([xg, cond], w, b, conditional=True,
                          dense1_w=d1, dense2_w=d2))
    np.testing.assert_allclose(np.asarray(out3), np.asarray(ref3),
                               rtol=1e-5, atol=1e-5)

    print("KERNEL_OK")
</pallas_src>

<mosaic_0001>
module attributes {stable_mosaic.version = 11 : i64} {
  func.func @_layernorm_kernel(%arg0: i32, %arg1: i32, %arg2: memref<1x8x32xf32, #tpu.memory_space<vmem>>, %arg3: memref<1x1x32xf32, #tpu.memory_space<vmem>>, %arg4: memref<1x1x32xf32, #tpu.memory_space<vmem>>, %arg5: memref<1x8x32xf32, #tpu.memory_space<vmem>>) attributes {dimension_semantics = [#tpu.dimension_semantics<parallel>, #tpu.dimension_semantics<parallel>], iteration_bounds = array<i64: 2, 1>, scalar_prefetch = 0 : i64, scratch_operands = 0 : i64, tpu.core_type = #tpu.core_type<tc>, window_params = [{transform_indices = @transform_0, window_bounds = array<i64: 1, 8, 32>}, {pipeline_mode = #tpu.pipeline_mode<synchronous>, transform_indices = @transform_1, window_bounds = array<i64: 1, 1, 32>}, {pipeline_mode = #tpu.pipeline_mode<synchronous>, transform_indices = @transform_2, window_bounds = array<i64: 1, 1, 32>}, {transform_indices = @transform_3, window_bounds = array<i64: 1, 8, 32>}]} {
    %c0 = arith.constant 0 : index
    %c0_0 = arith.constant 0 : index
    %c0_1 = arith.constant 0 : index
    %0 = vector.load %arg2[%c0, %c0_0, %c0_1] : memref<1x8x32xf32, #tpu.memory_space<vmem>>, vector<1x8x32xf32>
    %1 = vector.shape_cast %0 : vector<1x8x32xf32> to vector<8x32xf32>
    %cst = arith.constant dense<0.000000e+00> : vector<8xf32>
    %2 = vector.multi_reduction <add>, %1, %cst [1] : vector<8x32xf32> to vector<8xf32>
    %3 = vector.shape_cast %2 : vector<8xf32> to vector<8x1xf32>
    %cst_2 = arith.constant 3.200000e+01 : f32
    %4 = vector.broadcast %cst_2 : f32 to vector<8x1xf32>
    %5 = arith.divf %3, %4 : vector<8x1xf32>
    %6 = vector.broadcast %5 : vector<8x1xf32> to vector<8x32xf32>
    %7 = arith.subf %1, %6 : vector<8x32xf32>
    %8 = arith.mulf %7, %7 : vector<8x32xf32>
    %cst_3 = arith.constant dense<0.000000e+00> : vector<8xf32>
    %9 = vector.multi_reduction <add>, %8, %cst_3 [1] : vector<8x32xf32> to vector<8xf32>
    %10 = vector.shape_cast %9 : vector<8xf32> to vector<8x1xf32>
    %cst_4 = arith.constant 3.200000e+01 : f32
    %11 = vector.broadcast %cst_4 : f32 to vector<8x1xf32>
    %12 = arith.divf %10, %11 : vector<8x1xf32>
    %cst_5 = arith.constant 9.99999996E-13 : f32
    %13 = vector.broadcast %cst_5 : f32 to vector<8x1xf32>
    %14 = arith.addf %12, %13 : vector<8x1xf32>
    %15 = math.rsqrt %14 : vector<8x1xf32>
    %16 = vector.broadcast %15 : vector<8x1xf32> to vector<8x32xf32>
    %17 = arith.mulf %7, %16 : vector<8x32xf32>
    %c0_6 = arith.constant 0 : index
    %c0_7 = arith.constant 0 : index
    %c0_8 = arith.constant 0 : index
    %18 = vector.load %arg3[%c0_6, %c0_7, %c0_8] : memref<1x1x32xf32, #tpu.memory_space<vmem>>, vector<1x1x32xf32>
    %19 = vector.shape_cast %18 : vector<1x1x32xf32> to vector<1x32xf32>
    %c0_9 = arith.constant 0 : index
    %c0_10 = arith.constant 0 : index
    %c0_11 = arith.constant 0 : index
    %20 = vector.load %arg4[%c0_9, %c0_10, %c0_11] : memref<1x1x32xf32, #tpu.memory_space<vmem>>, vector<1x1x32xf32>
    %21 = vector.shape_cast %20 : vector<1x1x32xf32> to vector<1x32xf32>
    %22 = vector.broadcast %19 : vector<1x32xf32> to vector<8x32xf32>
    %23 = arith.mulf %22, %17 : vector<8x32xf32>
    %24 = vector.broadcast %21 : vector<1x32xf32> to vector<8x32xf32>
    %25 = arith.addf %23, %24 : vector<8x32xf32>
    %c0_12 = arith.constant 0 : index
    %c0_13 = arith.constant 0 : index
    %c0_14 = arith.constant 0 : index
    %26 = vector.load %arg5[%c0_12, %c0_13, %c0_14] : memref<1x8x32xf32, #tpu.memory_space<vmem>>, vector<1x8x32xf32>
    %27 = vector.shape_cast %26 : vector<1x8x32xf32> to vector<8x32xf32>
    %28 = vector.shape_cast %25 : vector<8x32xf32> to vector<1x8x32xf32>
    tpu.vector_store %arg5[%c0_12, %c0_13, %c0_14], %28 {strides = array<i32>} : memref<1x8x32xf32, #tpu.memory_space<vmem>>, vector<1x8x32xf32>,
    return
  }
  func.func @transform_0(%arg0: i32, %arg1: i32) -> (i32, i32, i32) {
    %c0_i32 = arith.constant 0 : i32
    %c0_i32_0 = arith.constant 0 : i32
    return %arg0, %arg1, %c0_i32 : i32, i32, i32
  }
  func.func @transform_1(%arg0: i32, %arg1: i32) -> (i32, i32, i32) {
    %c0_i32 = arith.constant 0 : i32
    %c0_i32_0 = arith.constant 0 : i32
    %c0_i32_1 = arith.constant 0 : i32
    %c0_i32_2 = arith.constant 0 : i32
    return %c0_i32, %c0_i32_0, %c0_i32_1 : i32, i32, i32
  }
  func.func @transform_2(%arg0: i32, %arg1: i32) -> (i32, i32, i32) {
    %c0_i32 = arith.constant 0 : i32
    %c0_i32_0 = arith.constant 0 : i32
    %c0_i32_1 = arith.constant 0 : i32
    %c0_i32_2 = arith.constant 0 : i32
    return %c0_i32, %c0_i32_0, %c0_i32_1 : i32, i32, i32
  }
  func.func @transform_3(%arg0: i32, %arg1: i32) -> (i32, i32, i32) {
    %c0_i32 = arith.constant 0 : i32
    %c0_i32_0 = arith.constant 0 : i32
    return %arg0, %arg1, %c0_i32 : i32, i32, i32
  }
}

</mosaic_0001>

<llo_original>
// kernel: tpu_custom_call.1
$region0: #{tpu_custom_call.1}
  #allocation0 [shape = 'u32[]', space=smem, size = 0x4, offset = 0x4, fixed_abs, tag = 'smem constant byte address 0x4 - core index']
  #allocation1 [shape = 'u32[144,128]{1,0:T(1,128)}', space=vmem, size = 0x12000, scoped, tag = 'internal scratch']
  %s0 = inlined_call_operand.hbm [shape: f32[2,8,32], index: 0, kind: input, shape index: {}]
  %s1 = inlined_call_operand.vmem [shape: f32[1,1,32], index: 1, kind: input, shape index: {}]
  %s2 = inlined_call_operand.vmem [shape: f32[1,1,32], index: 2, kind: input, shape index: {}]
  %s3 = inlined_call_operand.hbm [shape: f32[2,8,32], index: 3, kind: output, shape index: {}]
  %s4 = sld [smem:[#allocation0]]
  $region49: #{tpu_custom_call.1} parent=0
    _
  %s6 = ssub.s32 1, %s4
  %s7 = scalar_select 0, %s6, %s4
  $region1: #{tpu_custom_call.1} parent=0
    #allocation2 [shape = 'u8[8192]{0}', space=vmem, size = 0x2000, scoped, tag = 'input window, operand 0']
    #allocation3 [shape = 's32[2]{0}', space=sflag, size = 0x8, scoped, tag = 'scoped memory for tpu_custom_call.1']
    #allocation4 [shape = 's32[2]{0}', space=sflag, size = 0x8, scoped, tag = 'scoped memory for tpu_custom_call.1']
    #allocation5 [shape = 'u8[8192]{0}', space=vmem, size = 0x2000, scoped, tag = 'output window, operand 0']
    %8 = vsyncpa [#allocation3], 0
    %s9 = scalar_lea.sflag [#allocation3], 1
    %10 = vsyncpa %s9, 0
    %11 = vsyncpa [#allocation4], 0
    %s12 = scalar_lea.sflag [#allocation4], 1
    %13 = vsyncpa %s12, 0
    loop: start=0, step=1, limit=4
    $region2: #{tpu_custom_call.1} parent=1 // loop_pre_header
      _
    $region3: #{tpu_custom_call.1} parent=1 // loop_header
      %s15 = sphi 0, %s19
      %p16 = scmp.ge.s32.totalorder %s15, 4
      %s22 = sphi 0, %s34
      %s23 = sphi 0, %s30
      %s24 = sphi 0, %s22
      %s25 = sphi 0, %s23
      %s26 = sphi 0, %s24
      %s27 = sphi 0, %s25
      %s39 = sphi 0, %s41
      %s42 = sphi 0, %s39
      %s43 = sphi 0, %s42
      %s59 = sphi 0, %s43
      %s63 = sphi 0, %s63
      %s65 = sphi 0, %s63
      %s66 = sphi 0, %s65
      %s80 = sphi 0, %s66
      %s84 = sphi 0, %s84
      %s86 = sphi 0, %s84
      %s87 = sphi 0, %s86
      %s101 = sphi 0, %s87
      %s109 = sphi 0, %s111
      %s112 = sphi 0, %s109
      %s113 = sphi 0, %s112
      %s129 = sphi 0, %s113
    $region4: #{tpu_custom_call.1} parent=1 // loop_header_branch
      %18 = sbr.rel (%p16) target = $region8
    $region5: #{tpu_custom_call.1} parent=1 // loop_body
      %s20 = ssub.s32 %s15, 1
      %s21 = ssub.s32 %s15, 2
      %s28 = sadd.s32 1, %s23
      %p29 = scmp.ge.s32.totalorder %s28, 1
      %s30 = scalar_select %p29, 0, %s28
      %s31 = sadd.s32 1, %s22
      %s32 = scalar_select %p29, %s31, %s22
      %p33 = scmp.ge.s32.totalorder %s32, 2
      %s34 = scalar_select %p33, 0, %s32
      %s35 = ssub.s32 %s22, %s34
      %s36 = ssub.s32 %s23, %s30
      %s37 = sor.u32 %s35, %s36
      %p38 = scmp.eq.s32.totalorder %s37, 0
      %s40 = sadd.s32 %s39, 1
      %s41 = scalar_select %p38, %s39, %s40
      %p44 = pneg %p38
      %p45 = scmp.eq.s32.totalorder %s15, 1
      %p46 = por %p44, %p45
      %p47 = scmp.ne.s32.totalorder %s39, %s42
      %p48 = scmp.eq.s32.totalorder %s15, 0
      %p49 = por %p47, %p48
      %p50 = scmp.ne.s32.totalorder %s39, %s42
      %p51 = scmp.eq.s32.totalorder %s20, 1
      %p52 = por %p50, %p51
      %p53 = scmp.ne.s32.totalorder %s42, %s43
      %p54 = scmp.eq.s32.totalorder %s20, 0
      %p55 = por %p53, %p54
      %p56 = scmp.ne.s32.totalorder %s42, %s43
      %p57 = scmp.eq.s32.totalorder %s21, 1
      %p58 = por %p56, %p57
      %p60 = scmp.ne.s32.totalorder %s43, %s59
      %p61 = scmp.eq.s32.totalorder %s21, 0
      %p62 = por %p60, %p61
      %s64 = sadd.s32 %s63, 1
      %p67 = scmp.eq.s32.totalorder %s15, 1
      %p68 = scmp.ne.s32.totalorder %s63, %s65
      %p69 = scmp.eq.s32.totalorder %s15, 0
      %p70 = por %p68, %p69
      %p71 = scmp.ne.s32.totalorder %s63, %s65
      %p72 = scmp.eq.s32.totalorder %s20, 1
      %p73 = por %p71, %p72
      %p74 = scmp.ne.s32.totalorder %s65, %s66
      %p75 = scmp.eq.s32.totalorder %s20, 0
      %p76 = por %p74, %p75
      %p77 = scmp.ne.s32.totalorder %s65, %s66
      %p78 = scmp.eq.s32.totalorder %s21, 1
      %p79 = por %p77, %p78
      %p81 = scmp.ne.s32.totalorder %s66, %s80
      %p82 = scmp.eq.s32.totalorder %s21, 0
      %p83 = por %p81, %p82
      %s85 = sadd.s32 %s84, 1
      %p88 = scmp.eq.s32.totalorder %s15, 1
      %p89 = scmp.ne.s32.totalorder %s84, %s86
      %p90 = scmp.eq.s32.totalorder %s15, 0
      %p91 = por %p89, %p90
      %p92 = scmp.ne.s32.totalorder %s84, %s86
      %p93 = scmp.eq.s32.totalorder %s20, 1
      %p94 = por %p92, %p93
      %p95 = scmp.ne.s32.totalorder %s86, %s87
      %p96 = scmp.eq.s32.totalorder %s20, 0
      %p97 = por %p95, %p96
      %p98 = scmp.ne.s32.totalorder %s86, %s87
      %p99 = scmp.eq.s32.totalorder %s21, 1
      %p100 = por %p98, %p99
      %p102 = scmp.ne.s32.totalorder %s87, %s101
      %p103 = scmp.eq.s32.totalorder %s21, 0
      %p104 = por %p102, %p103
      %s105 = ssub.s32 %s22, %s34
      %s106 = ssub.s32 %s23, %s30
      %s107 = sor.u32 %s105, %s106
      %p108 = scmp.eq.s32.totalorder %s107, 0
      %s110 = sadd.s32 %s109, 1
      %s111 = scalar_select %p108, %s109, %s110
      %p114 = pneg %p108
      %p115 = scmp.eq.s32.totalorder %s15, 1
      %p116 = por %p114, %p115
      %p117 = scmp.ne.s32.totalorder %s109, %s112
      %p118 = scmp.eq.s32.totalorder %s15, 0
      %p119 = por %p117, %p118
      %p120 = scmp.ne.s32.totalorder %s109, %s112
      %p121 = scmp.eq.s32.totalorder %s20, 1
      %p122 = por %p120, %p121
      %p123 = scmp.ne.s32.totalorder %s112, %s113
      %p124 = scmp.eq.s32.totalorder %s20, 0
      %p125 = por %p123, %p124
      %p126 = scmp.ne.s32.totalorder %s112, %s113
      %p127 = scmp.eq.s32.totalorder %s21, 1
      %p128 = por %p126, %p127
      %p130 = scmp.ne.s32.totalorder %s113, %s129
      %p131 = scmp.eq.s32.totalorder %s21, 0
      %p132 = por %p130, %p131
      %p133 = scmp.le.s32.totalorder 1, %s15
      %p134 = scmp.lt.s32.totalorder %s15, 3
      %p135 = pnand %p133, %p134
      %p136 = pneg %p135
      // Predicated region
      $region9: #{tpu_custom_call.1} parent=5 // pred_check
        _
      $region10: #{tpu_custom_call.1} parent=5 // pred_check_branch
        %138 = sbr.rel (%p135) target = $region12
      $region11: #{tpu_custom_call.1} parent=5 // pred_region
        %s139 = ssub.s32 %s15, 1
        // Predicated region
        $region13: #{tpu_custom_call.1} parent=11 // pred_check
          %p140 = pneg %p76
        $region14: #{tpu_custom_call.1} parent=11 // pred_check_branch
          %142 = sbr.rel (%p140) target = $region16
        $region15: #{tpu_custom_call.1} parent=11 // pred_region
          _
        $region16: #{tpu_custom_call.1} parent=11 // pred_fallthru
          _
        // Predicated region
        $region17: #{tpu_custom_call.1} parent=11 // pred_check
          %p143 = pneg %p97
        $region18: #{tpu_custom_call.1} parent=11 // pred_check_branch
          %145 = sbr.rel (%p143) target = $region20
        $region19: #{tpu_custom_call.1} parent=11 // pred_region
          _
        $region20: #{tpu_custom_call.1} parent=11 // pred_fallthru
          _
      $region12: #{tpu_custom_call.1} parent=5 // pred_fallthru
        _
      %p146 = scmp.lt.s32.totalorder %s15, 2
      // Predicated region
      $region21: #{tpu_custom_call.1} parent=5 // pred_check
        %p147 = pneg %p146
      $region22: #{tpu_custom_call.1} parent=5 // pred_check_branch
        %149 = sbr.rel (%p147) target = $region24
      $region23: #{tpu_custom_call.1} parent=5 // pred_region
        // Predicated region
        $region25: #{tpu_custom_call.1} parent=23 // pred_check
          %p150 = pneg %p49
        $region26: #{tpu_custom_call.1} parent=23 // pred_check_branch
          %152 = sbr.rel (%p150) target = $region28
        $region27: #{tpu_custom_call.1} parent=23 // pred_region
          %s153 = sand.u32 %s39, 1
          %s154 = scalar_lea.sflag [#allocation3], %s153
          %s155 = sand.u32 %s39, 1
          %s156 = smul.addr %s155, 8
          %s157 = scalar_lea.vmem [#allocation2], %s156
          %s159 = ssub.s32 128, 128
          %160 = vsyncadd %s154, %s159
          %s161 = sadd.s32 %s23, %s22
          %s162 = smul.addr %s161, 128
          %s163 = scalar_lea.hbm %s0, %s162
          %s165 = sshll.u32 %s157, 4
          %s166 = int_to_ptr.vmem [resolvable:$true] %s165
          %168 = dma.hbm_to_vmem [thread:$0]  %s163, 128, %s166, %s154
        $region28: #{tpu_custom_call.1} parent=23 // pred_fallthru
          _
      $region24: #{tpu_custom_call.1} parent=5 // pred_fallthru
        _
      %p169 = scmp.le.s32.totalorder 1, %s15
      %p170 = scmp.lt.s32.totalorder %s15, 3
      %p171 = pnand %p169, %p170
      %p172 = pneg %p171
      // Predicated region
      $region29: #{tpu_custom_call.1} parent=5 // pred_check
        _
      $region30: #{tpu_custom_call.1} parent=5 // pred_check_branch
        %174 = sbr.rel (%p171) target = $region32
      $region31: #{tpu_custom_call.1} parent=5 // pred_region
        %s175 = ssub.s32 %s15, 1
        %s176 = sand.u32 %s42, 1
        %s177 = scalar_lea.sflag [#allocation3], %s176
        %s178 = sand.u32 %s42, 1
        %s179 = smul.addr %s178, 8
        %s180 = scalar_lea.vmem [#allocation2], %s179
        // Predicated region
        $region33: #{tpu_custom_call.1} parent=31 // pred_check
          %p181 = pneg %p55
        $region34: #{tpu_custom_call.1} parent=31 // pred_check_branch
          %183 = sbr.rel (%p181) target = $region36
        $region35: #{tpu_custom_call.1} parent=31 // pred_region
          %184 = dma.done %s177, 128
        $region36: #{tpu_custom_call.1} parent=31 // pred_fallthru
          _
        %s185 = sand.u32 %s42, 1
        %s186 = scalar_lea.sflag [#allocation3], %s185
        %s187 = sand.u32 %s42, 1
        %s188 = smul.addr %s187, 8
        %s189 = scalar_lea.vmem [#allocation2], %s188
        %p190 = pneg %p55
        %p191 = pneg %p52
        %p192 = pneg %p76
        %p193 = pneg %p73
        %p194 = pneg %p97
        %p195 = pneg %p94
        %p196 = pneg %p125
        %p197 = pneg %p122
        %s198 = sand.u32 %s112, 1
        %s199 = scalar_lea.sflag [#allocation4], %s198
        %s200 = sand.u32 %s112, 1
        %s201 = smul.addr %s200, 8
        %s202 = scalar_lea.vmem [#allocation5], %s201
        %v203 = vld [vmem:[%s180] sm:$0xff]
        %vm204 = vcmask 261120
        %v205 = vsel %vm204, %v203, 0.0
        %206 = vadd.xlane.f32.xlu0 %v205
        %v207 = vpop.xlane.xlu0 %206
        %v208 = vrcp.pop 32.0
        %v209 = vmul.f32 %v207, %v208
        %v210 = vsub.f32 %v203, %v209
        %v211 = vmul.f32 %v210, %v210
        %v212 = vsel %vm204, %v211, 0.0
        %213 = vadd.xlane.f32.xlu0 %v212
        %v214 = vpop.xlane.xlu0 %213
        %v215 = vmul.f32 %v214, %v208
        %v216 = vadd.f32 %v215, 1e-12
        %v217 = vrsqrt.pop %v216
        %v218 = vmul.f32 %v210, %v217
        %v219 = vld [vmem:[%s1] sm:$0x1]
        %v220 = vld [vmem:[%s2] sm:$0x1]
        %v222 = vlaneseq
        %v223 = vshrl.u32 %v222, 7
        %v224 = vsub.s32 0, %v223
        %v225 = vrot.slane %v219, %v224
        %v227 = vmul.f32 %v225, %v218
        %v229 = vlaneseq
        %v230 = vshrl.u32 %v229, 7
        %v231 = vsub.s32 0, %v230
        %v232 = vrot.slane %v220, %v231
        %v234 = vadd.f32 %v227, %v232
        %235 = vst.msk [vmem:[%s202] sm:$0xff] %vm204, %v234
        %s236 = sand.u32 %s112, 1
        %s237 = scalar_lea.sflag [#allocation4], %s236
        %s238 = sand.u32 %s112, 1
        %s239 = smul.addr %s238, 8
        %s240 = scalar_lea.vmem [#allocation5], %s239
        // Predicated region
        $region37: #{tpu_custom_call.1} parent=31 // pred_check
          %p241 = pneg %p122
        $region38: #{tpu_custom_call.1} parent=31 // pred_check_branch
          %243 = sbr.rel (%p241) target = $region40
        $region39: #{tpu_custom_call.1} parent=31 // pred_region
          %s245 = ssub.s32 128, 128
          %246 = vsyncadd %s237, %s245
          %s247 = sadd.s32 %s25, %s24
          %s248 = smul.addr %s247, 128
          %s249 = scalar_lea.hbm %s3, %s248
          %s251 = sshll.u32 %s240, 4
          %s252 = int_to_ptr.vmem [resolvable:$true] %s251
          %254 = dma.vmem_to_hbm [thread:$0]  %s252, 128, %s249, %s237
        $region40: #{tpu_custom_call.1} parent=31 // pred_fallthru
          _
      $region32: #{tpu_custom_call.1} parent=5 // pred_fallthru
        _
      %p255 = scmp.le.s32.totalorder 2, %s15
      // Predicated region
      $region41: #{tpu_custom_call.1} parent=5 // pred_check
        %p256 = pneg %p255
      $region42: #{tpu_custom_call.1} parent=5 // pred_check_branch
        %258 = sbr.rel (%p256) target = $region44
      $region43: #{tpu_custom_call.1} parent=5 // pred_region
        %s259 = ssub.s32 %s15, 2
        // Predicated region
        $region45: #{tpu_custom_call.1} parent=43 // pred_check
          %p260 = pneg %p128
        $region46: #{tpu_custom_call.1} parent=43 // pred_check_branch
          %262 = sbr.rel (%p260) target = $region48
        $region47: #{tpu_custom_call.1} parent=43 // pred_region
          %s263 = sand.u32 %s113, 1
          %s264 = scalar_lea.sflag [#allocation4], %s263
          %s265 = sand.u32 %s113, 1
          %s266 = smul.addr %s265, 8
          %s267 = scalar_lea.vmem [#allocation5], %s266
          %268 = dma.done %s264, 128
        $region48: #{tpu_custom_call.1} parent=43 // pred_fallthru
          _
      $region44: #{tpu_custom_call.1} parent=5 // pred_fallthru
        _
    $region6: #{tpu_custom_call.1} parent=1 // loop_footer
      %s19 = sadd.s32 1, %s15
    $region7: #{tpu_custom_call.1} parent=1 // loop_footer_branch
      %14 = sbr.rel target = $region3
    $region8: #{tpu_custom_call.1} parent=1 // loop_exit
      _
    %269 = vsyncpa [#allocation3], 1
    %s270 = scalar_lea.sflag [#allocation3], 1
    %271 = vsyncpa %s270, 1
    %272 = vsyncpa [#allocation4], 1
    %s273 = scalar_lea.sflag [#allocation4], 1
    %274 = vsyncpa %s273, 1

</llo_original>
